<compile_context>
chip_gen: v7x
topology: tpu7x:2x2x1
jax: 0.10.0
libtpu: 0.0.40
codegen_flags: <defaults>
</compile_context>

<pallas_src>
import math

import jax
import jax.numpy as jnp
from jax.experimental import pallas as pl
from jax.experimental.pallas import tpu as pltpu


def _make_kernel(lam_mask_len: float):
    """Build the per-block kernel. Closed-over values are Python floats only
    (NOT jnp arrays) so they lower as literals instead of captured constants."""
    L = float(lam_mask_len)            # lam * mask_length ; note a + b == L
    use_single_exp = L >= 30.0         # one-exp form exact to < e^-(L/2) here

    def kernel(lam_t_ref, a0_ref, apply_ref, x_ref, o_ref):
        # lam_t_ref : (1, bl)   lam * t for this lane block (VMEM-resident row)
        # a0_ref    : (bt, 1)   lam * t_cut per sample
        # apply_ref : (bt, 1)   1.0 if sample is augmented else 0.0
        # x_ref/o_ref : (bt, bl) lane-dense f32 waveform block
        a = lam_t_ref[...] - a0_ref[...]                  # lam*(t - t_cut), (bt, bl)
        if use_single_exp:
            # sigmoid(a)*sigmoid(L-a) ~= sigmoid(min(a, L-a)) when L is large.
            m = jnp.maximum(jnp.minimum(a, L - a), -60.0)
            mask = pl.reciprocal(1.0 + jnp.exp(-m), approx=True)
        else:
            # Exact two-exp form for small L. a + b = L > 0 so at most one of the
            # clamped exponents is large -> the product stays finite in f32.
            ac = jnp.clip(a, -60.0, 60.0)
            bc = jnp.clip(L - a, -60.0, 60.0)
            mask = pl.reciprocal((1.0 + jnp.exp(-ac)) * (1.0 + jnp.exp(-bc)),
                                 approx=True)
        mask = jnp.where(apply_ref[...] > 0.5, mask, 1.0)  # single vsel blend
        o_ref[...] = x_ref[...] * mask

    return kernel


def _choose_blocks(B, TC, target_block_bytes):
    """Pick (rows, lanes) per block. Blocks are ~target_block_bytes of f32 output."""
    row_bytes = TC * 4
    target_rows = max(1, target_block_bytes // row_bytes)
    if target_rows >= B:
        bt = B
        # keep >=2 row blocks for DMA/compute overlap + megacore on non-trivial arrays
        if B >= 16 and B * row_bytes > (1 << 20):
            bt = max(8, ((B // 2) // 8) * 8)
    else:
        bt = min(B, max(8, (target_rows // 8) * 8))
    bl = TC
    # Lane-axis tiling only when even the minimal row block blows the budget
    # (long-T / many-channel EEG) and the row is lane-tileable (multiple of 128).
    if bt * row_bytes > 2 * target_block_bytes and TC % 128 == 0 and TC > 128:
        want = max(128, ((target_block_bytes // (bt * 4)) // 128) * 128)
        bl = min(TC, want)
    return bt, bl


def smooth_time_mask(waveforms, key, mask_length=8, paug=0.5, lambda_val=10.0,
                     target_block_bytes=4 << 20):
    """waveforms: (B, T, C) float array. Returns masked float32 array, same shape."""
    B, T, C = waveforms.shape
    assert T > mask_length, "mask_length must be < time dimension"
    lam = float(lambda_val)

    k_apply, k_cut = jax.random.split(key)
    apply_flag = jax.random.uniform(k_apply, (B,)) < paug            # rand() < paug
    t_cut = jax.random.randint(k_cut, (B,), 0, T - mask_length,      # randint(0, T-ml)
                               dtype=jnp.int32)

    apply_f = apply_flag.astype(jnp.float32).reshape(B, 1)
    a0 = (lam * t_cut.astype(jnp.float32)).reshape(B, 1)             # lam * t_cut

    TC = T * C
    # Lane-dense f32 view (torch .float() contract); channels fold onto the lane axis.
    x2 = waveforms.astype(jnp.float32).reshape(B, TC)
    # Precomputed lam * t row (t = j // C for flattened column j), one tiny DMA,
    # VMEM-resident across all grid steps.
    lam_t = (lam * jnp.repeat(jnp.arange(T, dtype=jnp.float32), C)).reshape(1, TC)

    bt, bl = _choose_blocks(B, TC, target_block_bytes)
    grid = (pl.cdiv(B, bt), pl.cdiv(TC, bl))

    kernel = _make_kernel(lam * mask_length)

    n = B * TC
    cost = pl.CostEstimate(
        flops=int(6 * n),
        transcendentals=int(2 * n),
        bytes_accessed=int(8 * n + 4 * (TC + 2 * B)),
    )

    # NOTE: input_output_aliases={3: 0} (reuse the f32 waveform buffer) is a small
    # free win in production; omitted here to stay maximally portable across
    # interpret/compile execution paths.
    out2 = pl.pallas_call(
        kernel,
        out_shape=jax.ShapeDtypeStruct((B, TC), jnp.float32),
        grid_spec=pltpu.PrefetchScalarGridSpec(
            num_scalar_prefetch=0,
            grid=grid,
            in_specs=[
                pl.BlockSpec((1, bl), lambda i, j: (0, j)),     # lam*t row (resident)
                pl.BlockSpec((bt, 1), lambda i, j: (i, 0)),     # lam*t_cut per sample
                pl.BlockSpec((bt, 1), lambda i, j: (i, 0)),     # apply flag per sample
                pl.BlockSpec((bt, bl), lambda i, j: (i, j)),    # waveforms, lane-dense
            ],
            out_specs=pl.BlockSpec((bt, bl), lambda i, j: (i, j)),
        ),
        compiler_params=pltpu.CompilerParams(
            dimension_semantics=("parallel", "parallel"),       # disjoint blocks; megacore
            vmem_limit_bytes=32 << 20,                          # 4x ~4 MiB blocks + headroom
        ),
        cost_estimate=cost,
    )(lam_t, a0, apply_f, x2)
    return out2.reshape(B, T, C)


def _reference(waveforms, t_cut, apply_flag, mask_length, lambda_val):
    """Pure-JAX reference mirroring the numpy loop of the torch module."""
    B, T, C = waveforms.shape
    t = jnp.arange(T, dtype=jnp.float32)[None, :]
    tc = t_cut.astype(jnp.float32)[:, None]
    lam = float(lambda_val)
    m1 = 1.0 / (1.0 + jnp.exp(-lam * (t - tc)))
    m2 = 1.0 / (1.0 + jnp.exp(-lam * (tc + mask_length - t)))
    mask = m1 * m2
    ap = apply_flag.astype(jnp.float32)[:, None]
    mask = ap * mask + (1.0 - ap)
    return waveforms.astype(jnp.float32) * mask[:, :, None]


if __name__ == "__main__":
    key = jax.random.PRNGKey(0)
    k_data, k_aug = jax.random.split(key)

    B, T, C = 4, 32, 8
    mask_length, paug, lambda_val = 8, 0.5, 10.0

    waveforms = jax.random.normal(k_data, (B, T, C), dtype=jnp.float32)

    out = smooth_time_mask(waveforms, k_aug,
                           mask_length=mask_length, paug=paug, lambda_val=lambda_val)
    out = jax.block_until_ready(out)

    # sanity check against a pure-JAX reference using the identical random draws
    k_apply, k_cut = jax.random.split(k_aug)
    apply_flag = jax.random.uniform(k_apply, (B,)) < paug
    t_cut = jax.random.randint(k_cut, (B,), 0, T - mask_length, dtype=jnp.int32)
    ref = _reference(waveforms, t_cut, apply_flag, mask_length, lambda_val)

    assert out.shape == (B, T, C) and out.dtype == jnp.float32
    # approx reciprocal (~1e-3 rel) + single-exp mask algebra -> loosened tolerance
    assert jnp.allclose(out, ref, atol=1e-2, rtol=1e-2), float(jnp.max(jnp.abs(out - ref)))

    print("KERNEL_OK")
</pallas_src>

<mosaic_0001>
module attributes {stable_mosaic.version = 11 : i64} {
  func.func @kernel(%arg0: i32, %arg1: i32, %arg2: memref<1x256xf32, #tpu.memory_space<vmem>>, %arg3: memref<4x1xf32, #tpu.memory_space<vmem>>, %arg4: memref<4x1xf32, #tpu.memory_space<vmem>>, %arg5: memref<4x256xf32, #tpu.memory_space<vmem>>, %arg6: memref<4x256xf32, #tpu.memory_space<vmem>>) attributes {dimension_semantics = [#tpu.dimension_semantics<parallel>, #tpu.dimension_semantics<parallel>], iteration_bounds = array<i64: 1, 1>, scalar_prefetch = 0 : i64, scratch_operands = 0 : i64, tpu.core_type = #tpu.core_type<tc>, window_params = [{transform_indices = @transform_0, window_bounds = array<i64: 1, 256>}, {transform_indices = @transform_1, window_bounds = array<i64: 4, 1>}, {transform_indices = @transform_2, window_bounds = array<i64: 4, 1>}, {transform_indices = @transform_3, window_bounds = array<i64: 4, 256>}, {transform_indices = @transform_4, window_bounds = array<i64: 4, 256>}]} {
    %c0 = arith.constant 0 : index
    %c0_0 = arith.constant 0 : index
    %0 = vector.load %arg2[%c0, %c0_0] : memref<1x256xf32, #tpu.memory_space<vmem>>, vector<1x256xf32>
    %c0_1 = arith.constant 0 : index
    %c0_2 = arith.constant 0 : index
    %1 = vector.load %arg3[%c0_1, %c0_2] : memref<4x1xf32, #tpu.memory_space<vmem>>, vector<4x1xf32>
    %2 = vector.broadcast %0 : vector<1x256xf32> to vector<4x256xf32>
    %3 = vector.broadcast %1 : vector<4x1xf32> to vector<4x256xf32>
    %4 = arith.subf %2, %3 : vector<4x256xf32>
    %cst = arith.constant 8.000000e+01 : f32
    %5 = vector.broadcast %cst : f32 to vector<4x256xf32>
    %6 = arith.subf %5, %4 : vector<4x256xf32>
    %7 = arith.minimumf %4, %6 : vector<4x256xf32>
    %cst_3 = arith.constant -6.000000e+01 : f32
    %8 = vector.broadcast %cst_3 : f32 to vector<4x256xf32>
    %9 = arith.maximumf %7, %8 : vector<4x256xf32>
    %cst_4 = arith.constant 0.000000e+00 : f32
    %10 = vector.broadcast %cst_4 : f32 to vector<4x256xf32>
    %11 = arith.subf %10, %9 : vector<4x256xf32>
    %12 = math.exp %11 : vector<4x256xf32>
    %cst_5 = arith.constant 1.000000e+00 : f32
    %13 = vector.broadcast %cst_5 : f32 to vector<4x256xf32>
    %14 = arith.addf %13, %12 : vector<4x256xf32>
    %15 = tpu.reciprocal %14 {approx = true} : vector<4x256xf32> -> vector<4x256xf32>
    %c0_6 = arith.constant 0 : index
    %c0_7 = arith.constant 0 : index
    %16 = vector.load %arg4[%c0_6, %c0_7] : memref<4x1xf32, #tpu.memory_space<vmem>>, vector<4x1xf32>
    %cst_8 = arith.constant 5.000000e-01 : f32
    %17 = vector.broadcast %cst_8 : f32 to vector<4x1xf32>
    %18 = arith.cmpf ogt, %16, %17 : vector<4x1xf32>
    %cst_9 = arith.constant 1.000000e+00 : f32
    %19 = vector.shape_cast %18 : vector<4x1xi1> to vector<4x1xi1>
    %20 = vector.broadcast %19 : vector<4x1xi1> to vector<4x256xi1>
    %21 = vector.broadcast %cst_9 : f32 to vector<4x256xf32>
    %22 = arith.select %20, %15, %21 : vector<4x256xi1>, vector<4x256xf32>
    %c0_10 = arith.constant 0 : index
    %c0_11 = arith.constant 0 : index
    %23 = vector.load %arg5[%c0_10, %c0_11] : memref<4x256xf32, #tpu.memory_space<vmem>>, vector<4x256xf32>
    %24 = arith.mulf %23, %22 : vector<4x256xf32>
    %c0_12 = arith.constant 0 : index
    %c0_13 = arith.constant 0 : index
    %25 = vector.load %arg6[%c0_12, %c0_13] : memref<4x256xf32, #tpu.memory_space<vmem>>, vector<4x256xf32>
    tpu.vector_store %arg6[%c0_12, %c0_13], %24 {strides = array<i32>} : memref<4x256xf32, #tpu.memory_space<vmem>>, vector<4x256xf32>,
    return
  }
  func.func @transform_0(%arg0: i32, %arg1: i32) -> (i32, i32) {
    %c0_i32 = arith.constant 0 : i32
    %c0_i32_0 = arith.constant 0 : i32
    return %c0_i32, %arg1 : i32, i32
  }
  func.func @transform_1(%arg0: i32, %arg1: i32) -> (i32, i32) {
    %c0_i32 = arith.constant 0 : i32
    %c0_i32_0 = arith.constant 0 : i32
    return %arg0, %c0_i32 : i32, i32
  }
  func.func @transform_2(%arg0: i32, %arg1: i32) -> (i32, i32) {
    %c0_i32 = arith.constant 0 : i32
    %c0_i32_0 = arith.constant 0 : i32
    return %arg0, %c0_i32 : i32, i32
  }
  func.func @transform_3(%arg0: i32, %arg1: i32) -> (i32, i32) {
    %c0_i32 = arith.constant 0 : i32
    return %arg0, %arg1 : i32, i32
  }
  func.func @transform_4(%arg0: i32, %arg1: i32) -> (i32, i32) {
    %c0_i32 = arith.constant 0 : i32
    return %arg0, %arg1 : i32, i32
  }
}

</mosaic_0001>

<llo_original>
// kernel: tpu_custom_call.1
$region0: #{tpu_custom_call.1}
  #allocation0 [shape = 'u32[]', space=smem, size = 0x4, offset = 0x4, fixed_abs, tag = 'smem constant byte address 0x4 - core index']
  #allocation1 [shape = 'u32[144,128]{1,0:T(1,128)}', space=vmem, size = 0x12000, scoped, tag = 'internal scratch']
  %s0 = inlined_call_operand.vmem [shape: f32[1,256], index: 0, kind: input, shape index: {}]
  %s1 = inlined_call_operand.vmem [shape: f32[4,1], index: 1, kind: input, shape index: {}]
  %s2 = inlined_call_operand.vmem [shape: f32[4,1], index: 2, kind: input, shape index: {}]
  %s3 = inlined_call_operand.vmem [shape: f32[4,256], index: 3, kind: input, shape index: {}]
  %s4 = inlined_call_operand.hbm [shape: f32[4,256], index: 4, kind: output, shape index: {}]
  %s5 = sld [smem:[#allocation0]]
  $region26: #{tpu_custom_call.1} parent=0
    _
  %s7 = ssub.s32 1, %s5
  %s8 = scalar_select 0, %s7, %s5
  $region1: #{tpu_custom_call.1} parent=0
    #allocation2 [shape = 'u8[4096]{0}', space=vmem, size = 0x1000, scoped, tag = 'output window, operand 0, single buffered']
    #allocation3 [shape = 's32[1]{0}', space=sflag, size = 0x4, scoped, tag = 'scoped memory for tpu_custom_call.1']
    %9 = vsyncpa [#allocation3], 0
    // Predicated region
    $region2: #{tpu_custom_call.1} parent=1 // pred_check
      _
    $region3: #{tpu_custom_call.1} parent=1 // pred_check_branch
      %11 = sbr.rel (0) target = $region5
    $region4: #{tpu_custom_call.1} parent=1 // pred_region
      _
    $region5: #{tpu_custom_call.1} parent=1 // pred_fallthru
      _
    // Predicated region
    $region6: #{tpu_custom_call.1} parent=1 // pred_check
      _
    $region7: #{tpu_custom_call.1} parent=1 // pred_check_branch
      %13 = sbr.rel (0) target = $region9
    $region8: #{tpu_custom_call.1} parent=1 // pred_region
      _
    $region9: #{tpu_custom_call.1} parent=1 // pred_fallthru
      _
    // Predicated region
    $region10: #{tpu_custom_call.1} parent=1 // pred_check
      _
    $region11: #{tpu_custom_call.1} parent=1 // pred_check_branch
      %15 = sbr.rel (0) target = $region13
    $region12: #{tpu_custom_call.1} parent=1 // pred_region
      _
    $region13: #{tpu_custom_call.1} parent=1 // pred_fallthru
      _
    // Predicated region
    $region14: #{tpu_custom_call.1} parent=1 // pred_check
      _
    $region15: #{tpu_custom_call.1} parent=1 // pred_check_branch
      %17 = sbr.rel (0) target = $region17
    $region16: #{tpu_custom_call.1} parent=1 // pred_region
      _
    $region17: #{tpu_custom_call.1} parent=1 // pred_fallthru
      _
    %v18 = vld [vmem:[%s0] sm:$0x3]
    %v19 = vld [vmem:[%s1] sm:$0xf]
    %v21 = vlaneseq
    %v22 = vshrl.u32 %v21, 7
    %v23 = vsub.s32 0, %v22
    %v24 = vrot.slane %v18, %v23
    %v25 = vlaneseq
    %v26 = vshrl.u32 %v25, 7
    %v27 = vsub.s32 1, %v26
    %v28 = vrot.slane %v18, %v27
    %32 = vset.pattern.permute.xlu0 0
    %33 = vperm.xlu0 %32, %v19
    %v34 = vpop.permute.xlu0 %33
    %v36 = vsub.f32 %v24, %v34
    %v37 = vsub.f32 %v28, %v34
    %v38 = vsub.f32 80.0, %v36
    %v39 = vsub.f32 80.0, %v37
    %v40 = vmin.f32 %v36, %v38
    %v41 = vmin.f32 %v37, %v39
    %v42 = vmax.f32 %v40, -60.0
    %v43 = vmax.f32 %v41, -60.0
    %v44 = vsub.f32 0.0, %v42
    %v45 = vsub.f32 0.0, %v43
    %v46 = vmul.f32 %v44, 1.442695
    %v47 = vpow.pop %v46
    %v48 = vmul.f32 %v45, 1.442695
    %v49 = vpow.pop %v48
    %v50 = vadd.f32 %v47, 1.0
    %v51 = vadd.f32 %v49, 1.0
    %v52 = vrcp.pop %v50
    %v53 = vrcp.pop %v51
    %v54 = vld [vmem:[%s2] sm:$0xf]
    %vm55 = vcmp.gt.f32.partialorder %v54, 0.5
    %v56 = vsel %vm55, 1, 0
    %57 = vset.pattern.permute.xlu0 0
    %58 = vperm.xlu0 %57, %v56
    %v59 = vpop.permute.xlu0 %58
    %vm60 = vcmp.eq.s32.totalorder %v59, 1
    %v61 = vsel %vm60, %v52, 1.0
    %v62 = vsel %vm60, %v53, 1.0
    %v63 = vld [vmem:[%s3] sm:$0xff]
    %v66 = vcombine.low %v61, %v62
    %v68 = vmul.f32 %v63, %v66
    %69 = vst [vmem:[#allocation2] sm:$0xff] %v68
    // Predicated region
    $region18: #{tpu_custom_call.1} parent=1 // pred_check
      _
    $region19: #{tpu_custom_call.1} parent=1 // pred_check_branch
      %71 = sbr.rel (0) target = $region21
    $region20: #{tpu_custom_call.1} parent=1 // pred_region
      %s73 = ssub.s32 128, 128
      %74 = vsyncadd [#allocation3], %s73
      %s76 = sshll.u32 [#allocation2], 4
      %s77 = int_to_ptr.vmem [resolvable:$true] %s76
      %79 = dma.vmem_to_hbm [thread:$0]  %s77, 128, %s4, [#allocation3]
    $region21: #{tpu_custom_call.1} parent=1 // pred_fallthru
      _
    // Predicated region
    $region22: #{tpu_custom_call.1} parent=1 // pred_check
      _
    $region23: #{tpu_custom_call.1} parent=1 // pred_check_branch
      %81 = sbr.rel (0) target = $region25
    $region24: #{tpu_custom_call.1} parent=1 // pred_region
      %82 = dma.done [#allocation3], 128
    $region25: #{tpu_custom_call.1} parent=1 // pred_fallthru
      _
    %83 = vsyncpa [#allocation3], 1

</llo_original>
